<compile_context>
chip_gen: v6e
topology: v6e:2x2x1
jax: 0.10.0
libtpu: 0.0.40
codegen_flags: <defaults>
</compile_context>

<pallas_src>
import functools

import jax
import jax.numpy as jnp
from jax import lax
from jax.experimental import pallas as pl
from jax.experimental.pallas import tpu as pltpu


def _round_up(x, m):
    return ((x + m - 1) // m) * m


def _iou_kernel(src1_ref, dst1_ref, src2_ref, dst2_ref, out_ref,
                inter_acc, s1_acc, s2_acc, *, tile_n, n_pad):
    r = pl.program_id(0)

    @pl.when(r == 0)
    def _init():
        inter_acc[...] = jnp.zeros_like(inter_acc)
        s1_acc[...] = jnp.zeros_like(s1_acc)
        s2_acc[...] = jnp.zeros_like(s2_acc)

    e_pad = src1_ref.shape[1]
    row_start = r * tile_n

    # Shared iotas, reused for both edge lists.
    row_ids = lax.broadcasted_iota(jnp.int32, (tile_n, e_pad), 0) + row_start
    col_ids = lax.broadcasted_iota(jnp.int32, (e_pad, n_pad), 1)

    def adj_tile(src_ref, dst_ref):
        # src_ref: (1, e_pad) int32 (lane-major), dst_ref: (e_pad, 1) int32
        # (sublane-major, pre-transposed in the wrapper).
        src_oh = (row_ids == src_ref[...]).astype(jnp.bfloat16)   # (tile_n, e_pad)
        dst_oh = (col_ids == dst_ref[...]).astype(jnp.bfloat16)   # (e_pad, n_pad)
        raw = jnp.dot(src_oh, dst_oh, preferred_element_type=jnp.float32)
        # Duplicate edges must still give 1.0 (scatter .set semantics); clamp
        # BEFORE the product/sums below.
        return jnp.minimum(raw, 1.0)                              # (tile_n, n_pad)

    a1 = adj_tile(src1_ref, dst1_ref)
    a2 = adj_tile(src2_ref, dst2_ref)

    # 0/1 adjacencies: min = a1*a2, max = a1 + a2 - a1*a2.
    inter_acc[...] += jnp.sum(a1 * a2)
    s1_acc[...] += jnp.sum(a1)
    s2_acc[...] += jnp.sum(a2)

    @pl.when(r == pl.num_programs(0) - 1)
    def _finalize():
        inter = inter_acc[...]
        union = s1_acc[...] + s2_acc[...] - inter
        out_ref[...] = inter / union


def iou_loss(edges1, edges2, num_nodes):
    """Pallas equivalent of IoULoss.forward(edges1, edges2, num_nodes)."""
    num_nodes = int(num_nodes)
    e1 = jnp.asarray(edges1, jnp.int32)
    e2 = jnp.asarray(edges2, jnp.int32)

    # Shared, 128-aligned edge padding (-1 sentinels match no node id >= 0).
    e_pad = max(128, _round_up(max(e1.shape[1], e2.shape[1]), 128))

    def prep(e):
        pad = e_pad - e.shape[1]
        if pad:
            e = jnp.pad(e, ((0, 0), (0, pad)), constant_values=-1)
        src = e[0:1, :]                      # (1, e_pad)  -> lane-major row
        dst = e[1, :].reshape(e_pad, 1)      # (e_pad, 1)  -> pre-transposed col
        return src, dst

    src1, dst1 = prep(e1)
    src2, dst2 = prep(e2)

    # Pad N to a multiple of the row tile (256-aligned MXU tiles when N allows).
    n128 = _round_up(max(num_nodes, 1), 128)
    tile_n = 256 if n128 >= 256 else n128
    n_pad = _round_up(n128, tile_n)
    grid_rows = n_pad // tile_n

    kernel = functools.partial(_iou_kernel, tile_n=tile_n, n_pad=n_pad)

    flops = 2 * (2 * n_pad * n_pad * e_pad)          # two (N,E)x(E,N) matmuls
    bytes_accessed = 4 * (4 * e_pad) + 4             # edge ids in + scalar out

    out = pl.pallas_call(
        kernel,
        out_shape=jax.ShapeDtypeStruct((1, 1), jnp.float32),
        grid_spec=pltpu.PrefetchScalarGridSpec(
            num_scalar_prefetch=0,
            grid=(grid_rows,),
            in_specs=[
                pl.BlockSpec((1, e_pad), lambda r: (0, 0)),
                pl.BlockSpec((e_pad, 1), lambda r: (0, 0)),
                pl.BlockSpec((1, e_pad), lambda r: (0, 0)),
                pl.BlockSpec((e_pad, 1), lambda r: (0, 0)),
            ],
            out_specs=pl.BlockSpec((1, 1), lambda r: (0, 0)),
            scratch_shapes=[pltpu.VMEM((1, 1), jnp.float32)] * 3,
        ),
        compiler_params=pltpu.CompilerParams(
            # Row axis accumulates into shared scratch -> must stay on one core.
            dimension_semantics=("arbitrary",),
            vmem_limit_bytes=32 * 1024 * 1024,
        ),
        cost_estimate=pl.CostEstimate(
            flops=flops, transcendentals=0, bytes_accessed=bytes_accessed),
    )(src1, dst1, src2, dst2)
    return out[0, 0]


def iou_loss_ref(edges1, edges2, num_nodes):
    """Pure-JAX reference mirroring the PyTorch module."""
    def to_adj(edges):
        adj = jnp.zeros((num_nodes, num_nodes), jnp.float32)
        return adj.at[edges[0], edges[1]].set(1.0)
    a1, a2 = to_adj(edges1), to_adj(edges2)
    return jnp.sum(jnp.minimum(a1, a2)) / jnp.sum(jnp.maximum(a1, a2))


if __name__ == "__main__":
    key = jax.random.PRNGKey(0)
    k1, k2 = jax.random.split(key)

    num_nodes = 16
    edges1 = jax.random.randint(k1, (2, 10), 0, num_nodes, dtype=jnp.int32)
    edges2 = jax.random.randint(k2, (2, 12), 0, num_nodes, dtype=jnp.int32)

    out = iou_loss(edges1, edges2, num_nodes)
    jax.block_until_ready(out)

    ref = iou_loss_ref(edges1, edges2, num_nodes)
    assert jnp.allclose(out, ref, atol=1e-6), (out, ref)
    print("KERNEL_OK")
</pallas_src>

<mosaic_0001>
module attributes {stable_mosaic.version = 11 : i64} {
  func.func @_iou_kernel(%arg0: i32, %arg1: memref<1x128xi32, #tpu.memory_space<vmem>>, %arg2: memref<128x1xi32, #tpu.memory_space<vmem>>, %arg3: memref<1x128xi32, #tpu.memory_space<vmem>>, %arg4: memref<128x1xi32, #tpu.memory_space<vmem>>, %arg5: memref<1x1xf32, #tpu.memory_space<vmem>>, %arg6: memref<1x1xf32, #tpu.memory_space<vmem>>, %arg7: memref<1x1xf32, #tpu.memory_space<vmem>>, %arg8: memref<1x1xf32, #tpu.memory_space<vmem>>) attributes {dimension_semantics = [#tpu.dimension_semantics<arbitrary>], iteration_bounds = array<i64: 1>, scalar_prefetch = 0 : i64, scratch_operands = 3 : i64, tpu.core_type = #tpu.core_type<tc>, window_params = [{pipeline_mode = #tpu.pipeline_mode<synchronous>, transform_indices = @transform_0, window_bounds = array<i64: 1, 128>}, {pipeline_mode = #tpu.pipeline_mode<synchronous>, transform_indices = @transform_1, window_bounds = array<i64: 128, 1>}, {pipeline_mode = #tpu.pipeline_mode<synchronous>, transform_indices = @transform_2, window_bounds = array<i64: 1, 128>}, {pipeline_mode = #tpu.pipeline_mode<synchronous>, transform_indices = @transform_3, window_bounds = array<i64: 128, 1>}, {pipeline_mode = #tpu.pipeline_mode<synchronous>, transform_indices = @transform_4, window_bounds = array<i64: 1, 1>}]} {
    %c0_i32 = arith.constant 0 : i32
    %0 = arith.cmpi eq, %arg0, %c0_i32 : i32
    %1 = arith.extui %0 : i1 to i32
    %c0_i32_0 = arith.constant 0 : i32
    %2 = arith.cmpi ne, %1, %c0_i32_0 : i32
    scf.if %2 {
      %cst_28 = arith.constant 0.000000e+00 : f32
      %66 = vector.broadcast %cst_28 : f32 to vector<1x1xf32>
      %c0_29 = arith.constant 0 : index
      %c0_30 = arith.constant 0 : index
      %67 = vector.load %arg6[%c0_29, %c0_30] : memref<1x1xf32, #tpu.memory_space<vmem>>, vector<1x1xf32>
      tpu.vector_store %arg6[%c0_29, %c0_30], %66 {strides = array<i32>} : memref<1x1xf32, #tpu.memory_space<vmem>>, vector<1x1xf32>,
      %cst_31 = arith.constant 0.000000e+00 : f32
      %68 = vector.broadcast %cst_31 : f32 to vector<1x1xf32>
      %c0_32 = arith.constant 0 : index
      %c0_33 = arith.constant 0 : index
      %69 = vector.load %arg7[%c0_32, %c0_33] : memref<1x1xf32, #tpu.memory_space<vmem>>, vector<1x1xf32>
      tpu.vector_store %arg7[%c0_32, %c0_33], %68 {strides = array<i32>} : memref<1x1xf32, #tpu.memory_space<vmem>>, vector<1x1xf32>,
      %cst_34 = arith.constant 0.000000e+00 : f32
      %70 = vector.broadcast %cst_34 : f32 to vector<1x1xf32>
      %c0_35 = arith.constant 0 : index
      %c0_36 = arith.constant 0 : index
      %71 = vector.load %arg8[%c0_35, %c0_36] : memref<1x1xf32, #tpu.memory_space<vmem>>, vector<1x1xf32>
      tpu.vector_store %arg8[%c0_35, %c0_36], %70 {strides = array<i32>} : memref<1x1xf32, #tpu.memory_space<vmem>>, vector<1x1xf32>,
    } else {
    }
    %c128_i32 = arith.constant 128 : i32
    %3 = arith.muli %arg0, %c128_i32 : i32
    %4 = tpu.iota {dimensions = array<i32: 0>} : vector<128x128xi32>
    %5 = vector.broadcast %3 : i32 to vector<128x128xi32>
    %6 = arith.addi %4, %5 : vector<128x128xi32>
    %7 = tpu.iota {dimensions = array<i32: 1>} : vector<128x128xi32>
    %c0 = arith.constant 0 : index
    %c0_1 = arith.constant 0 : index
    %8 = vector.load %arg1[%c0, %c0_1] : memref<1x128xi32, #tpu.memory_space<vmem>>, vector<1x128xi32>
    %9 = vector.broadcast %8 : vector<1x128xi32> to vector<128x128xi32>
    %10 = arith.cmpi eq, %6, %9 : vector<128x128xi32>
    %11 = arith.extui %10 : vector<128x128xi1> to vector<128x128xi32>
    %12 = arith.sitofp %11 : vector<128x128xi32> to vector<128x128xf32>
    %13 = arith.truncf %12 : vector<128x128xf32> to vector<128x128xbf16>
    %c0_2 = arith.constant 0 : index
    %c0_3 = arith.constant 0 : index
    %14 = vector.load %arg2[%c0_2, %c0_3] : memref<128x1xi32, #tpu.memory_space<vmem>>, vector<128x1xi32>
    %15 = vector.broadcast %14 : vector<128x1xi32> to vector<128x128xi32>
    %16 = arith.cmpi eq, %7, %15 : vector<128x128xi32>
    %17 = arith.extui %16 : vector<128x128xi1> to vector<128x128xi32>
    %18 = arith.sitofp %17 : vector<128x128xi32> to vector<128x128xf32>
    %19 = arith.truncf %18 : vector<128x128xf32> to vector<128x128xbf16>
    %cst = arith.constant dense<0.000000e+00> : vector<128x128xf32>
    %20 = tpu.matmul %13, %19, %cst {dimension_numbers = #tpu.dot_dimension_numbers<[1], [0], [0], [1], [0, 0, 1, 1], [], []>} : vector<128x128xbf16>, vector<128x128xbf16>, vector<128x128xf32> -> vector<128x128xf32>
    %cst_4 = arith.constant 1.000000e+00 : f32
    %21 = vector.broadcast %cst_4 : f32 to vector<128x128xf32>
    %22 = arith.minimumf %20, %21 : vector<128x128xf32>
    %c0_5 = arith.constant 0 : index
    %c0_6 = arith.constant 0 : index
    %23 = vector.load %arg3[%c0_5, %c0_6] : memref<1x128xi32, #tpu.memory_space<vmem>>, vector<1x128xi32>
    %24 = vector.broadcast %23 : vector<1x128xi32> to vector<128x128xi32>
    %25 = arith.cmpi eq, %6, %24 : vector<128x128xi32>
    %26 = arith.extui %25 : vector<128x128xi1> to vector<128x128xi32>
    %27 = arith.sitofp %26 : vector<128x128xi32> to vector<128x128xf32>
    %28 = arith.truncf %27 : vector<128x128xf32> to vector<128x128xbf16>
    %c0_7 = arith.constant 0 : index
    %c0_8 = arith.constant 0 : index
    %29 = vector.load %arg4[%c0_7, %c0_8] : memref<128x1xi32, #tpu.memory_space<vmem>>, vector<128x1xi32>
    %30 = vector.broadcast %29 : vector<128x1xi32> to vector<128x128xi32>
    %31 = arith.cmpi eq, %7, %30 : vector<128x128xi32>
    %32 = arith.extui %31 : vector<128x128xi1> to vector<128x128xi32>
    %33 = arith.sitofp %32 : vector<128x128xi32> to vector<128x128xf32>
    %34 = arith.truncf %33 : vector<128x128xf32> to vector<128x128xbf16>
    %cst_9 = arith.constant dense<0.000000e+00> : vector<128x128xf32>
    %35 = tpu.matmul %28, %34, %cst_9 {dimension_numbers = #tpu.dot_dimension_numbers<[1], [0], [0], [1], [0, 0, 1, 1], [], []>} : vector<128x128xbf16>, vector<128x128xbf16>, vector<128x128xf32> -> vector<128x128xf32>
    %cst_10 = arith.constant 1.000000e+00 : f32
    %36 = vector.broadcast %cst_10 : f32 to vector<128x128xf32>
    %37 = arith.minimumf %35, %36 : vector<128x128xf32>
    %c0_11 = arith.constant 0 : index
    %c0_12 = arith.constant 0 : index
    %38 = vector.load %arg6[%c0_11, %c0_12] : memref<1x1xf32, #tpu.memory_space<vmem>>, vector<1x1xf32>
    %39 = arith.mulf %22, %37 : vector<128x128xf32>
    %40 = vector.shape_cast %39 : vector<128x128xf32> to vector<1x128x128xf32>
    %cst_13 = arith.constant dense<0.000000e+00> : vector<1xf32>
    %41 = vector.multi_reduction <add>, %40, %cst_13 [1, 2] : vector<1x128x128xf32> to vector<1xf32>
    %42 = vector.shape_cast %41 : vector<1xf32> to vector<1x1x1xf32>
    %43 = vector.extract %42[0, 0, 0] : f32 from vector<1x1x1xf32>
    %44 = vector.broadcast %43 : f32 to vector<1x1xf32>
    %45 = arith.addf %38, %44 : vector<1x1xf32>
    %c0_14 = arith.constant 0 : index
    %c0_15 = arith.constant 0 : index
    %46 = vector.load %arg6[%c0_14, %c0_15] : memref<1x1xf32, #tpu.memory_space<vmem>>, vector<1x1xf32>
    tpu.vector_store %arg6[%c0_14, %c0_15], %45 {strides = array<i32>} : memref<1x1xf32, #tpu.memory_space<vmem>>, vector<1x1xf32>,
    %c0_16 = arith.constant 0 : index
    %c0_17 = arith.constant 0 : index
    %47 = vector.load %arg7[%c0_16, %c0_17] : memref<1x1xf32, #tpu.memory_space<vmem>>, vector<1x1xf32>
    %48 = vector.shape_cast %22 : vector<128x128xf32> to vector<1x128x128xf32>
    %cst_18 = arith.constant dense<0.000000e+00> : vector<1xf32>
    %49 = vector.multi_reduction <add>, %48, %cst_18 [1, 2] : vector<1x128x128xf32> to vector<1xf32>
    %50 = vector.shape_cast %49 : vector<1xf32> to vector<1x1x1xf32>
    %51 = vector.extract %50[0, 0, 0] : f32 from vector<1x1x1xf32>
    %52 = vector.broadcast %51 : f32 to vector<1x1xf32>
    %53 = arith.addf %47, %52 : vector<1x1xf32>
    %c0_19 = arith.constant 0 : index
    %c0_20 = arith.constant 0 : index
    %54 = vector.load %arg7[%c0_19, %c0_20] : memref<1x1xf32, #tpu.memory_space<vmem>>, vector<1x1xf32>
    tpu.vector_store %arg7[%c0_19, %c0_20], %53 {strides = array<i32>} : memref<1x1xf32, #tpu.memory_space<vmem>>, vector<1x1xf32>,
    %c0_21 = arith.constant 0 : index
    %c0_22 = arith.constant 0 : index
    %55 = vector.load %arg8[%c0_21, %c0_22] : memref<1x1xf32, #tpu.memory_space<vmem>>, vector<1x1xf32>
    %56 = vector.shape_cast %37 : vector<128x128xf32> to vector<1x128x128xf32>
    %cst_23 = arith.constant dense<0.000000e+00> : vector<1xf32>
    %57 = vector.multi_reduction <add>, %56, %cst_23 [1, 2] : vector<1x128x128xf32> to vector<1xf32>
    %58 = vector.shape_cast %57 : vector<1xf32> to vector<1x1x1xf32>
    %59 = vector.extract %58[0, 0, 0] : f32 from vector<1x1x1xf32>
    %60 = vector.broadcast %59 : f32 to vector<1x1xf32>
    %61 = arith.addf %55, %60 : vector<1x1xf32>
    %c0_24 = arith.constant 0 : index
    %c0_25 = arith.constant 0 : index
    %62 = vector.load %arg8[%c0_24, %c0_25] : memref<1x1xf32, #tpu.memory_space<vmem>>, vector<1x1xf32>
    tpu.vector_store %arg8[%c0_24, %c0_25], %61 {strides = array<i32>} : memref<1x1xf32, #tpu.memory_space<vmem>>, vector<1x1xf32>,
    %c0_i32_26 = arith.constant 0 : i32
    %63 = arith.cmpi eq, %arg0, %c0_i32_26 : i32
    %64 = arith.extui %63 : i1 to i32
    %c0_i32_27 = arith.constant 0 : i32
    %65 = arith.cmpi ne, %64, %c0_i32_27 : i32
    scf.if %65 {
      %c0_28 = arith.constant 0 : index
      %c0_29 = arith.constant 0 : index
      %66 = vector.load %arg6[%c0_28, %c0_29] : memref<1x1xf32, #tpu.memory_space<vmem>>, vector<1x1xf32>
      %c0_30 = arith.constant 0 : index
      %c0_31 = arith.constant 0 : index
      %67 = vector.load %arg7[%c0_30, %c0_31] : memref<1x1xf32, #tpu.memory_space<vmem>>, vector<1x1xf32>
      %c0_32 = arith.constant 0 : index
      %c0_33 = arith.constant 0 : index
      %68 = vector.load %arg8[%c0_32, %c0_33] : memref<1x1xf32, #tpu.memory_space<vmem>>, vector<1x1xf32>
      %69 = arith.addf %67, %68 : vector<1x1xf32>
      %70 = arith.subf %69, %66 : vector<1x1xf32>
      %71 = arith.divf %66, %70 : vector<1x1xf32>
      %c0_34 = arith.constant 0 : index
      %c0_35 = arith.constant 0 : index
      %72 = vector.load %arg5[%c0_34, %c0_35] : memref<1x1xf32, #tpu.memory_space<vmem>>, vector<1x1xf32>
      tpu.vector_store %arg5[%c0_34, %c0_35], %71 {strides = array<i32>} : memref<1x1xf32, #tpu.memory_space<vmem>>, vector<1x1xf32>,
    } else {
    }
    return
  }
  func.func @transform_0(%arg0: i32) -> (i32, i32) {
    %c0_i32 = arith.constant 0 : i32
    %c0_i32_0 = arith.constant 0 : i32
    %c0_i32_1 = arith.constant 0 : i32
    return %c0_i32, %c0_i32_0 : i32, i32
  }
  func.func @transform_1(%arg0: i32) -> (i32, i32) {
    %c0_i32 = arith.constant 0 : i32
    %c0_i32_0 = arith.constant 0 : i32
    %c0_i32_1 = arith.constant 0 : i32
    return %c0_i32, %c0_i32_0 : i32, i32
  }
  func.func @transform_2(%arg0: i32) -> (i32, i32) {
    %c0_i32 = arith.constant 0 : i32
    %c0_i32_0 = arith.constant 0 : i32
    %c0_i32_1 = arith.constant 0 : i32
    return %c0_i32, %c0_i32_0 : i32, i32
  }
  func.func @transform_3(%arg0: i32) -> (i32, i32) {
    %c0_i32 = arith.constant 0 : i32
    %c0_i32_0 = arith.constant 0 : i32
    %c0_i32_1 = arith.constant 0 : i32
    return %c0_i32, %c0_i32_0 : i32, i32
  }
  func.func @transform_4(%arg0: i32) -> (i32, i32) {
    %c0_i32 = arith.constant 0 : i32
    %c0_i32_0 = arith.constant 0 : i32
    %c0_i32_1 = arith.constant 0 : i32
    return %c0_i32, %c0_i32_0 : i32, i32
  }
}

</mosaic_0001>

<llo_original>
// kernel: tpu_custom_call.1
$region0: #{tpu_custom_call.1}
  #allocation0 [shape = 'u32[]', space=smem, size = 0x4, offset = 0x4, fixed_abs, tag = 'smem constant byte address 0x4 - core index']
  #allocation1 [shape = 'u32[144,128]{1,0:T(1,128)}', space=vmem, size = 0x12000, scoped, tag = 'internal scratch']
  #allocation2 [shape = 'f32[1,1]{1,0:T(1,128)}', space=vmem, size = 0x200, scoped, tag = 'scratch operand']
  #allocation3 [shape = 'f32[1,1]{1,0:T(1,128)}', space=vmem, size = 0x200, scoped, tag = 'scratch operand']
  #allocation4 [shape = 'f32[1,1]{1,0:T(1,128)}', space=vmem, size = 0x200, scoped, tag = 'scratch operand']
  %s0 = inlined_call_operand.vmem [shape: s32[1,128], index: 0, kind: input, shape index: {}]
  %s1 = inlined_call_operand.vmem [shape: s32[128,1], index: 1, kind: input, shape index: {}]
  %s2 = inlined_call_operand.vmem [shape: s32[1,128], index: 2, kind: input, shape index: {}]
  %s3 = inlined_call_operand.vmem [shape: s32[128,1], index: 3, kind: input, shape index: {}]
  %s4 = inlined_call_operand.hbm [shape: f32[1,1], index: 4, kind: output, shape index: {}]
  %s5 = sld [smem:[#allocation0]]
  $region34: #{tpu_custom_call.1} parent=0
    _
  %s7 = ssub.s32 1, %s5
  %s8 = scalar_select 0, %s7, %s5
  $region1: #{tpu_custom_call.1} parent=0
    #allocation5 [shape = 'u8[512]{0}', space=vmem, size = 0x400, scoped, tag = 'output window, operand 0, single buffered']
    #allocation6 [shape = 's32[1]{0}', space=sflag, size = 0x4, scoped, tag = 'scoped memory for tpu_custom_call.1']
    %9 = vsyncpa [#allocation6], 0
    // Predicated region
    $region2: #{tpu_custom_call.1} parent=1 // pred_check
      _
    $region3: #{tpu_custom_call.1} parent=1 // pred_check_branch
      %11 = sbr.rel (0) target = $region5
    $region4: #{tpu_custom_call.1} parent=1 // pred_region
      _
    $region5: #{tpu_custom_call.1} parent=1 // pred_fallthru
      _
    // Predicated region
    $region6: #{tpu_custom_call.1} parent=1 // pred_check
      _
    $region7: #{tpu_custom_call.1} parent=1 // pred_check_branch
      %13 = sbr.rel (0) target = $region9
    $region8: #{tpu_custom_call.1} parent=1 // pred_region
      _
    $region9: #{tpu_custom_call.1} parent=1 // pred_fallthru
      _
    // Predicated region
    $region10: #{tpu_custom_call.1} parent=1 // pred_check
      _
    $region11: #{tpu_custom_call.1} parent=1 // pred_check_branch
      %15 = sbr.rel (0) target = $region13
    $region12: #{tpu_custom_call.1} parent=1 // pred_region
      _
    $region13: #{tpu_custom_call.1} parent=1 // pred_fallthru
      _
    // Predicated region
    $region14: #{tpu_custom_call.1} parent=1 // pred_check
      _
    $region15: #{tpu_custom_call.1} parent=1 // pred_check_branch
      %17 = sbr.rel (0) target = $region17
    $region16: #{tpu_custom_call.1} parent=1 // pred_region
      _
    $region17: #{tpu_custom_call.1} parent=1 // pred_fallthru
      _
    %p19 = scmp.eq.s32.totalorder 0, 0
    // Predicated region
    $region18: #{tpu_custom_call.1} parent=1 // pred_check
      %p20 = pneg %p19
    $region19: #{tpu_custom_call.1} parent=1 // pred_check_branch
      %22 = sbr.rel (%p20) target = $region21
    $region20: #{tpu_custom_call.1} parent=1 // pred_region
      %vm23 = vcmask 0
      %24 = vst.msk [vmem:[#allocation2] sm:$0x1] %vm23, 0.0
      %25 = vst.msk [vmem:[#allocation3] sm:$0x1] %vm23, 0.0
      %26 = vst.msk [vmem:[#allocation4] sm:$0x1] %vm23, 0.0
    $region21: #{tpu_custom_call.1} parent=1 // pred_fallthru
      _
    %s27 = smul.u32 0, 128
    %v28 = vlaneseq
    %v29 = vshrl.u32 %v28, 7
    %v30 = vadd.s32 %v29, 8
    %v31 = vadd.s32 %v29, 16
    %v32 = vadd.s32 %v29, 24
    %v33 = vadd.s32 %v29, 32
    %v34 = vadd.s32 %v29, 40
    %v35 = vadd.s32 %v29, 48
    %v36 = vadd.s32 %v29, 56
    %v37 = vadd.s32 %v29, 64
    %v38 = vadd.s32 %v29, 72
    %v39 = vadd.s32 %v29, 80
    %v40 = vadd.s32 %v29, 88
    %v41 = vadd.s32 %v29, 96
    %v42 = vadd.s32 %v29, 104
    %v43 = vadd.s32 %v29, 112
    %v44 = vadd.s32 %v29, 120
    %v45 = vstv %s27
    %v46 = vadd.s32 %v29, %v45
    %v47 = vadd.s32 %v30, %v45
    %v48 = vadd.s32 %v31, %v45
    %v49 = vadd.s32 %v32, %v45
    %v50 = vadd.s32 %v33, %v45
    %v51 = vadd.s32 %v34, %v45
    %v52 = vadd.s32 %v35, %v45
    %v53 = vadd.s32 %v36, %v45
    %v54 = vadd.s32 %v37, %v45
    %v55 = vadd.s32 %v38, %v45
    %v56 = vadd.s32 %v39, %v45
    %v57 = vadd.s32 %v40, %v45
    %v58 = vadd.s32 %v41, %v45
    %v59 = vadd.s32 %v42, %v45
    %v60 = vadd.s32 %v43, %v45
    %v61 = vadd.s32 %v44, %v45
    %v62 = vlaneseq
    %v63 = vand.u32 %v62, 127
    %v64 = vld [vmem:[%s0] sm:$0x1]
    %v65 = vlaneseq
    %v66 = vshrl.u32 %v65, 7
    %v67 = vsub.s32 0, %v66
    %v68 = vrot.slane %v64, %v67
    %vm69 = vcmp.eq.s32.totalorder %v46, %v68
    %vm70 = vcmp.eq.s32.totalorder %v47, %v68
    %vm71 = vcmp.eq.s32.totalorder %v48, %v68
    %vm72 = vcmp.eq.s32.totalorder %v49, %v68
    %vm73 = vcmp.eq.s32.totalorder %v50, %v68
    %vm74 = vcmp.eq.s32.totalorder %v51, %v68
    %vm75 = vcmp.eq.s32.totalorder %v52, %v68
    %vm76 = vcmp.eq.s32.totalorder %v53, %v68
    %vm77 = vcmp.eq.s32.totalorder %v54, %v68
    %vm78 = vcmp.eq.s32.totalorder %v55, %v68
    %vm79 = vcmp.eq.s32.totalorder %v56, %v68
    %vm80 = vcmp.eq.s32.totalorder %v57, %v68
    %vm81 = vcmp.eq.s32.totalorder %v58, %v68
    %vm82 = vcmp.eq.s32.totalorder %v59, %v68
    %vm83 = vcmp.eq.s32.totalorder %v60, %v68
    %vm84 = vcmp.eq.s32.totalorder %v61, %v68
    %v85 = vsel %vm69, 1, 0
    %v86 = vsel %vm70, 1, 0
    %v87 = vsel %vm71, 1, 0
    %v88 = vsel %vm72, 1, 0
    %v89 = vsel %vm73, 1, 0
    %v90 = vsel %vm74, 1, 0
    %v91 = vsel %vm75, 1, 0
    %v92 = vsel %vm76, 1, 0
    %v93 = vsel %vm77, 1, 0
    %v94 = vsel %vm78, 1, 0
    %v95 = vsel %vm79, 1, 0
    %v96 = vsel %vm80, 1, 0
    %v97 = vsel %vm81, 1, 0
    %v98 = vsel %vm82, 1, 0
    %v99 = vsel %vm83, 1, 0
    %v100 = vsel %vm84, 1, 0
    %v101 = vcvt.s32.f32 %v85
    %v102 = vcvt.s32.f32 %v86
    %v103 = vcvt.s32.f32 %v87
    %v104 = vcvt.s32.f32 %v88
    %v105 = vcvt.s32.f32 %v89
    %v106 = vcvt.s32.f32 %v90
    %v107 = vcvt.s32.f32 %v91
    %v108 = vcvt.s32.f32 %v92
    %v109 = vcvt.s32.f32 %v93
    %v110 = vcvt.s32.f32 %v94
    %v111 = vcvt.s32.f32 %v95
    %v112 = vcvt.s32.f32 %v96
    %v113 = vcvt.s32.f32 %v97
    %v114 = vcvt.s32.f32 %v98
    %v115 = vcvt.s32.f32 %v99
    %v116 = vcvt.s32.f32 %v100
    %v117 = vpack.c.bf16 %v102, %v101
    %v118 = vpack.c.bf16 %v104, %v103
    %v119 = vpack.c.bf16 %v106, %v105
    %v120 = vpack.c.bf16 %v108, %v107
    %v121 = vpack.c.bf16 %v110, %v109
    %v122 = vpack.c.bf16 %v112, %v111
    %v123 = vpack.c.bf16 %v114, %v113
    %v124 = vpack.c.bf16 %v116, %v115
    %v125 = vld [vmem:[%s1] sm:$0xff]
    %v126 = vld [vmem:[%s1 + $0x8] sm:$0xff]
    %v127 = vld [vmem:[%s1 + $0x10] sm:$0xff]
    %v128 = vld [vmem:[%s1 + $0x18] sm:$0xff]
    %v129 = vld [vmem:[%s1 + $0x20] sm:$0xff]
    %v130 = vld [vmem:[%s1 + $0x28] sm:$0xff]
    %v131 = vld [vmem:[%s1 + $0x30] sm:$0xff]
    %v132 = vld [vmem:[%s1 + $0x38] sm:$0xff]
    %v133 = vld [vmem:[%s1 + $0x40] sm:$0xff]
    %v134 = vld [vmem:[%s1 + $0x48] sm:$0xff]
    %v135 = vld [vmem:[%s1 + $0x50] sm:$0xff]
    %v136 = vld [vmem:[%s1 + $0x58] sm:$0xff]
    %v137 = vld [vmem:[%s1 + $0x60] sm:$0xff]
    %v138 = vld [vmem:[%s1 + $0x68] sm:$0xff]
    %v139 = vld [vmem:[%s1 + $0x70] sm:$0xff]
    %v140 = vld [vmem:[%s1 + $0x78] sm:$0xff]
    %141 = vset.pattern.permute.xlu0 0
    %142 = vperm.xlu0 %141, %v125
    %v143 = vpop.permute.xlu0 %142
    %144 = vset.pattern.permute.xlu0 0
    %145 = vperm.xlu0 %144, %v126
    %v146 = vpop.permute.xlu0 %145
    %147 = vset.pattern.permute.xlu0 0
    %148 = vperm.xlu0 %147, %v127
    %v149 = vpop.permute.xlu0 %148
    %150 = vset.pattern.permute.xlu0 0
    %151 = vperm.xlu0 %150, %v128
    %v152 = vpop.permute.xlu0 %151
    %153 = vset.pattern.permute.xlu0 0
    %154 = vperm.xlu0 %153, %v129
    %v155 = vpop.permute.xlu0 %154
    %156 = vset.pattern.permute.xlu0 0
    %157 = vperm.xlu0 %156, %v130
    %v158 = vpop.permute.xlu0 %157
    %159 = vset.pattern.permute.xlu0 0
    %160 = vperm.xlu0 %159, %v131
    %v161 = vpop.permute.xlu0 %160
    %162 = vset.pattern.permute.xlu0 0
    %163 = vperm.xlu0 %162, %v132
    %v164 = vpop.permute.xlu0 %163
    %165 = vset.pattern.permute.xlu0 0
    %166 = vperm.xlu0 %165, %v133
    %v167 = vpop.permute.xlu0 %166
    %168 = vset.pattern.permute.xlu0 0
    %169 = vperm.xlu0 %168, %v134
    %v170 = vpop.permute.xlu0 %169
    %171 = vset.pattern.permute.xlu0 0
    %172 = vperm.xlu0 %171, %v135
    %v173 = vpop.permute.xlu0 %172
    %174 = vset.pattern.permute.xlu0 0
    %175 = vperm.xlu0 %174, %v136
    %v176 = vpop.permute.xlu0 %175
    %177 = vset.pattern.permute.xlu0 0
    %178 = vperm.xlu0 %177, %v137
    %v179 = vpop.permute.xlu0 %178
    %180 = vset.pattern.permute.xlu0 0
    %181 = vperm.xlu0 %180, %v138
    %v182 = vpop.permute.xlu0 %181
    %183 = vset.pattern.permute.xlu0 0
    %184 = vperm.xlu0 %183, %v139
    %v185 = vpop.permute.xlu0 %184
    %186 = vset.pattern.permute.xlu0 0
    %187 = vperm.xlu0 %186, %v140
    %v188 = vpop.permute.xlu0 %187
    %vm189 = vcmp.eq.s32.totalorder %v63, %v143
    %vm190 = vcmp.eq.s32.totalorder %v63, %v146
    %vm191 = vcmp.eq.s32.totalorder %v63, %v149
    %vm192 = vcmp.eq.s32.totalorder %v63, %v152
    %vm193 = vcmp.eq.s32.totalorder %v63, %v155
    %vm194 = vcmp.eq.s32.totalorder %v63, %v158
    %vm195 = vcmp.eq.s32.totalorder %v63, %v161
    %vm196 = vcmp.eq.s32.totalorder %v63, %v164
    %vm197 = vcmp.eq.s32.totalorder %v63, %v167
    %vm198 = vcmp.eq.s32.totalorder %v63, %v170
    %vm199 = vcmp.eq.s32.totalorder %v63, %v173
    %vm200 = vcmp.eq.s32.totalorder %v63, %v176
    %vm201 = vcmp.eq.s32.totalorder %v63, %v179
    %vm202 = vcmp.eq.s32.totalorder %v63, %v182
    %vm203 = vcmp.eq.s32.totalorder %v63, %v185
    %vm204 = vcmp.eq.s32.totalorder %v63, %v188
    %v205 = vsel %vm189, 1, 0
    %v206 = vsel %vm190, 1, 0
    %v207 = vsel %vm191, 1, 0
    %v208 = vsel %vm192, 1, 0
    %v209 = vsel %vm193, 1, 0
    %v210 = vsel %vm194, 1, 0
    %v211 = vsel %vm195, 1, 0
    %v212 = vsel %vm196, 1, 0
    %v213 = vsel %vm197, 1, 0
    %v214 = vsel %vm198, 1, 0
    %v215 = vsel %vm199, 1, 0
    %v216 = vsel %vm200, 1, 0
    %v217 = vsel %vm201, 1, 0
    %v218 = vsel %vm202, 1, 0
    %v219 = vsel %vm203, 1, 0
    %v220 = vsel %vm204, 1, 0
    %v221 = vcvt.s32.f32 %v205
    %v222 = vcvt.s32.f32 %v206
    %v223 = vcvt.s32.f32 %v207
    %v224 = vcvt.s32.f32 %v208
    %v225 = vcvt.s32.f32 %v209
    %v226 = vcvt.s32.f32 %v210
    %v227 = vcvt.s32.f32 %v211
    %v228 = vcvt.s32.f32 %v212
    %v229 = vcvt.s32.f32 %v213
    %v230 = vcvt.s32.f32 %v214
    %v231 = vcvt.s32.f32 %v215
    %v232 = vcvt.s32.f32 %v216
    %v233 = vcvt.s32.f32 %v217
    %v234 = vcvt.s32.f32 %v218
    %v235 = vcvt.s32.f32 %v219
    %v236 = vcvt.s32.f32 %v220
    %v237 = vpack.c.bf16 %v222, %v221
    %v238 = vpack.c.bf16 %v224, %v223
    %v239 = vpack.c.bf16 %v226, %v225
    %v240 = vpack.c.bf16 %v228, %v227
    %v241 = vpack.c.bf16 %v230, %v229
    %v242 = vpack.c.bf16 %v232, %v231
    %v243 = vpack.c.bf16 %v234, %v233
    %v244 = vpack.c.bf16 %v236, %v235
    %245 = vmatprep.subr.bf16.mxu0 0
    %246 = vmatpush1.bf16.msra.mxu0 %v244
    %247 = vmatprep.subr.bf16.mxu0 0
    %248 = vmatpush1.bf16.msra.mxu0 %v243
    %249 = vmatprep.subr.bf16.mxu0 0
    %250 = vmatpush1.bf16.msra.mxu0 %v242
    %251 = vmatprep.subr.bf16.mxu0 0
    %252 = vmatpush1.bf16.msra.mxu0 %v241
    %253 = vmatprep.subr.bf16.mxu0 0
    %254 = vmatpush1.bf16.msra.mxu0 %v240
    %255 = vmatprep.subr.bf16.mxu0 0
    %256 = vmatpush1.bf16.msra.mxu0 %v239
    %257 = vmatprep.subr.bf16.mxu0 0
    %258 = vmatpush1.bf16.msra.mxu0 %v238
    %259 = vmatprep.subr.bf16.mxu0 0
    %260 = vmatpush1.bf16.msra.mxu0 %v237
    %261 = vmatprep.subr.bf16.mxu0 0
    %262 = vmatpush2.bf16.msra.mxu0 0
    %263 = vmatprep.subr.bf16.mxu0 0
    %264 = vmatpush2.bf16.msra.mxu0 0
    %265 = vmatprep.subr.bf16.mxu0 0
    %266 = vmatpush2.bf16.msra.mxu0 0
    %267 = vmatprep.subr.bf16.mxu0 0
    %268 = vmatpush2.bf16.msra.mxu0 0
    %269 = vmatprep.subr.bf16.mxu0 0
    %270 = vmatpush2.bf16.msra.mxu0 0
    %271 = vmatprep.subr.bf16.mxu0 0
    %272 = vmatpush2.bf16.msra.mxu0 0
    %273 = vmatprep.subr.bf16.mxu0 0
    %274 = vmatpush2.bf16.msra.mxu0 0
    %275 = vmatprep.subr.bf16.mxu0 0
    %276 = vmatpush2.bf16.msra.mxu0 0
    %277 = vmatprep.mubr.bf16.mxu0 0
    %278 = vmatmul.mubr.bf16.gmra.mxu0 %v117
    %v279 = vpop.f32.mrf.mxu0
    %v280 = vadd.f32 0.0, %v279
    %v281 = vpop.f32.mrf.mxu0
    %v282 = vpop.f32.mrf.mxu0
    %v283 = vadd.f32 0.0, %v282
    %v284 = vpop.f32.mrf.mxu0
    %285 = vmatprep.mubr.bf16.mxu0 0
    %286 = vmatmul.mubr.bf16.gmra.mxu0 %v118
    %v287 = vpop.f32.mrf.mxu0
    %v288 = vadd.f32 0.0, %v287
    %v289 = vpop.f32.mrf.mxu0
    %v290 = vpop.f32.mrf.mxu0
    %v291 = vadd.f32 0.0, %v290
    %v292 = vpop.f32.mrf.mxu0
    %293 = vmatprep.mubr.bf16.mxu0 0
    %294 = vmatmul.mubr.bf16.gmra.mxu0 %v119
    %v295 = vpop.f32.mrf.mxu0
    %v296 = vadd.f32 0.0, %v295
    %v297 = vpop.f32.mrf.mxu0
    %v298 = vpop.f32.mrf.mxu0
    %v299 = vadd.f32 0.0, %v298
    %v300 = vpop.f32.mrf.mxu0
    %301 = vmatprep.mubr.bf16.mxu0 0
    %302 = vmatmul.mubr.bf16.gmra.mxu0 %v120
    %v303 = vpop.f32.mrf.mxu0
    %v304 = vadd.f32 0.0, %v303
    %v305 = vpop.f32.mrf.mxu0
    %v306 = vpop.f32.mrf.mxu0
    %v307 = vadd.f32 0.0, %v306
    %v308 = vpop.f32.mrf.mxu0
    %309 = vmatprep.mubr.bf16.mxu0 0
    %310 = vmatmul.mubr.bf16.gmra.mxu0 %v121
    %v311 = vpop.f32.mrf.mxu0
    %v312 = vadd.f32 0.0, %v311
    %v313 = vpop.f32.mrf.mxu0
    %v314 = vpop.f32.mrf.mxu0
    %v315 = vadd.f32 0.0, %v314
    %v316 = vpop.f32.mrf.mxu0
    %317 = vmatprep.mubr.bf16.mxu0 0
    %318 = vmatmul.mubr.bf16.gmra.mxu0 %v122
    %v319 = vpop.f32.mrf.mxu0
    %v320 = vadd.f32 0.0, %v319
    %v321 = vpop.f32.mrf.mxu0
    %v322 = vpop.f32.mrf.mxu0
    %v323 = vadd.f32 0.0, %v322
    %v324 = vpop.f32.mrf.mxu0
    %325 = vmatprep.mubr.bf16.mxu0 0
    %326 = vmatmul.mubr.bf16.gmra.mxu0 %v123
    %v327 = vpop.f32.mrf.mxu0
    %v328 = vadd.f32 0.0, %v327
    %v329 = vpop.f32.mrf.mxu0
    %v330 = vpop.f32.mrf.mxu0
    %v331 = vadd.f32 0.0, %v330
    %v332 = vpop.f32.mrf.mxu0
    %333 = vmatprep.mubr.bf16.mxu0 0
    %334 = vmatmul.mubr.bf16.gmra.mxu0 %v124
    %v335 = vpop.f32.mrf.mxu0
    %v336 = vadd.f32 0.0, %v335
    %v337 = vpop.f32.mrf.mxu0
    %v338 = vpop.f32.mrf.mxu0
    %v339 = vadd.f32 0.0, %v338
    %v340 = vpop.f32.mrf.mxu0
    %341 = vdwg.mxu0
    %v342 = vmin.f32 %v280, 1.0
    %v343 = vmin.f32 %v283, 1.0
    %v344 = vmin.f32 %v288, 1.0
    %v345 = vmin.f32 %v291, 1.0
    %v346 = vmin.f32 %v296, 1.0
    %v347 = vmin.f32 %v299, 1.0
    %v348 = vmin.f32 %v304, 1.0
    %v349 = vmin.f32 %v307, 1.0
    %v350 = vmin.f32 %v312, 1.0
    %v351 = vmin.f32 %v315, 1.0
    %v352 = vmin.f32 %v320, 1.0
    %v353 = vmin.f32 %v323, 1.0
    %v354 = vmin.f32 %v328, 1.0
    %v355 = vmin.f32 %v331, 1.0
    %v356 = vmin.f32 %v336, 1.0
    %v357 = vmin.f32 %v339, 1.0
    %v358 = vld [vmem:[%s2] sm:$0x1]
    %v359 = vlaneseq
    %v360 = vshrl.u32 %v359, 7
    %v361 = vsub.s32 0, %v360
    %v362 = vrot.slane %v358, %v361
    %vm363 = vcmp.eq.s32.totalorder %v46, %v362
    %vm364 = vcmp.eq.s32.totalorder %v47, %v362
    %vm365 = vcmp.eq.s32.totalorder %v48, %v362
    %vm366 = vcmp.eq.s32.totalorder %v49, %v362
    %vm367 = vcmp.eq.s32.totalorder %v50, %v362
    %vm368 = vcmp.eq.s32.totalorder %v51, %v362
    %vm369 = vcmp.eq.s32.totalorder %v52, %v362
    %vm370 = vcmp.eq.s32.totalorder %v53, %v362
    %vm371 = vcmp.eq.s32.totalorder %v54, %v362
    %vm372 = vcmp.eq.s32.totalorder %v55, %v362
    %vm373 = vcmp.eq.s32.totalorder %v56, %v362
    %vm374 = vcmp.eq.s32.totalorder %v57, %v362
    %vm375 = vcmp.eq.s32.totalorder %v58, %v362
    %vm376 = vcmp.eq.s32.totalorder %v59, %v362
    %vm377 = vcmp.eq.s32.totalorder %v60, %v362
    %vm378 = vcmp.eq.s32.totalorder %v61, %v362
    %v379 = vsel %vm363, 1, 0
    %v380 = vsel %vm364, 1, 0
    %v381 = vsel %vm365, 1, 0
    %v382 = vsel %vm366, 1, 0
    %v383 = vsel %vm367, 1, 0
    %v384 = vsel %vm368, 1, 0
    %v385 = vsel %vm369, 1, 0
    %v386 = vsel %vm370, 1, 0
    %v387 = vsel %vm371, 1, 0
    %v388 = vsel %vm372, 1, 0
    %v389 = vsel %vm373, 1, 0
    %v390 = vsel %vm374, 1, 0
    %v391 = vsel %vm375, 1, 0
    %v392 = vsel %vm376, 1, 0
    %v393 = vsel %vm377, 1, 0
    %v394 = vsel %vm378, 1, 0
    %v395 = vcvt.s32.f32 %v379
    %v396 = vcvt.s32.f32 %v380
    %v397 = vcvt.s32.f32 %v381
    %v398 = vcvt.s32.f32 %v382
    %v399 = vcvt.s32.f32 %v383
    %v400 = vcvt.s32.f32 %v384
    %v401 = vcvt.s32.f32 %v385
    %v402 = vcvt.s32.f32 %v386
    %v403 = vcvt.s32.f32 %v387
    %v404 = vcvt.s32.f32 %v388
    %v405 = vcvt.s32.f32 %v389
    %v406 = vcvt.s32.f32 %v390
    %v407 = vcvt.s32.f32 %v391
    %v408 = vcvt.s32.f32 %v392
    %v409 = vcvt.s32.f32 %v393
    %v410 = vcvt.s32.f32 %v394
    %v411 = vpack.c.bf16 %v396, %v395
    %v412 = vpack.c.bf16 %v398, %v397
    %v413 = vpack.c.bf16 %v400, %v399
    %v414 = vpack.c.bf16 %v402, %v401
    %v415 = vpack.c.bf16 %v404, %v403
    %v416 = vpack.c.bf16 %v406, %v405
    %v417 = vpack.c.bf16 %v408, %v407
    %v418 = vpack.c.bf16 %v410, %v409
    %v419 = vld [vmem:[%s3] sm:$0xff]
    %v420 = vld [vmem:[%s3 + $0x8] sm:$0xff]
    %v421 = vld [vmem:[%s3 + $0x10] sm:$0xff]
    %v422 = vld [vmem:[%s3 + $0x18] sm:$0xff]
    %v423 = vld [vmem:[%s3 + $0x20] sm:$0xff]
    %v424 = vld [vmem:[%s3 + $0x28] sm:$0xff]
    %v425 = vld [vmem:[%s3 + $0x30] sm:$0xff]
    %v426 = vld [vmem:[%s3 + $0x38] sm:$0xff]
    %v427 = vld [vmem:[%s3 + $0x40] sm:$0xff]
    %v428 = vld [vmem:[%s3 + $0x48] sm:$0xff]
    %v429 = vld [vmem:[%s3 + $0x50] sm:$0xff]
    %v430 = vld [vmem:[%s3 + $0x58] sm:$0xff]
    %v431 = vld [vmem:[%s3 + $0x60] sm:$0xff]
    %v432 = vld [vmem:[%s3 + $0x68] sm:$0xff]
    %v433 = vld [vmem:[%s3 + $0x70] sm:$0xff]
    %v434 = vld [vmem:[%s3 + $0x78] sm:$0xff]
    %435 = vset.pattern.permute.xlu0 0
    %436 = vperm.xlu0 %435, %v419
    %v437 = vpop.permute.xlu0 %436
    %438 = vset.pattern.permute.xlu0 0
    %439 = vperm.xlu0 %438, %v420
    %v440 = vpop.permute.xlu0 %439
    %441 = vset.pattern.permute.xlu0 0
    %442 = vperm.xlu0 %441, %v421
    %v443 = vpop.permute.xlu0 %442
    %444 = vset.pattern.permute.xlu0 0
    %445 = vperm.xlu0 %444, %v422
    %v446 = vpop.permute.xlu0 %445
    %447 = vset.pattern.permute.xlu0 0
    %448 = vperm.xlu0 %447, %v423
    %v449 = vpop.permute.xlu0 %448
    %450 = vset.pattern.permute.xlu0 0
    %451 = vperm.xlu0 %450, %v424
    %v452 = vpop.permute.xlu0 %451
    %453 = vset.pattern.permute.xlu0 0
    %454 = vperm.xlu0 %453, %v425
    %v455 = vpop.permute.xlu0 %454
    %456 = vset.pattern.permute.xlu0 0
    %457 = vperm.xlu0 %456, %v426
    %v458 = vpop.permute.xlu0 %457
    %459 = vset.pattern.permute.xlu0 0
    %460 = vperm.xlu0 %459, %v427
    %v461 = vpop.permute.xlu0 %460
    %462 = vset.pattern.permute.xlu0 0
    %463 = vperm.xlu0 %462, %v428
    %v464 = vpop.permute.xlu0 %463
    %465 = vset.pattern.permute.xlu0 0
    %466 = vperm.xlu0 %465, %v429
    %v467 = vpop.permute.xlu0 %466
    %468 = vset.pattern.permute.xlu0 0
    %469 = vperm.xlu0 %468, %v430
    %v470 = vpop.permute.xlu0 %469
    %471 = vset.pattern.permute.xlu0 0
    %472 = vperm.xlu0 %471, %v431
    %v473 = vpop.permute.xlu0 %472
    %474 = vset.pattern.permute.xlu0 0
    %475 = vperm.xlu0 %474, %v432
    %v476 = vpop.permute.xlu0 %475
    %477 = vset.pattern.permute.xlu0 0
    %478 = vperm.xlu0 %477, %v433
    %v479 = vpop.permute.xlu0 %478
    %480 = vset.pattern.permute.xlu0 0
    %481 = vperm.xlu0 %480, %v434
    %v482 = vpop.permute.xlu0 %481
    %vm483 = vcmp.eq.s32.totalorder %v63, %v437
    %vm484 = vcmp.eq.s32.totalorder %v63, %v440
    %vm485 = vcmp.eq.s32.totalorder %v63, %v443
    %vm486 = vcmp.eq.s32.totalorder %v63, %v446
    %vm487 = vcmp.eq.s32.totalorder %v63, %v449
    %vm488 = vcmp.eq.s32.totalorder %v63, %v452
    %vm489 = vcmp.eq.s32.totalorder %v63, %v455
    %vm490 = vcmp.eq.s32.totalorder %v63, %v458
    %vm491 = vcmp.eq.s32.totalorder %v63, %v461
    %vm492 = vcmp.eq.s32.totalorder %v63, %v464
    %vm493 = vcmp.eq.s32.totalorder %v63, %v467
    %vm494 = vcmp.eq.s32.totalorder %v63, %v470
    %vm495 = vcmp.eq.s32.totalorder %v63, %v473
    %vm496 = vcmp.eq.s32.totalorder %v63, %v476
    %vm497 = vcmp.eq.s32.totalorder %v63, %v479
    %vm498 = vcmp.eq.s32.totalorder %v63, %v482
    %v499 = vsel %vm483, 1, 0
    %v500 = vsel %vm484, 1, 0
    %v501 = vsel %vm485, 1, 0
    %v502 = vsel %vm486, 1, 0
    %v503 = vsel %vm487, 1, 0
    %v504 = vsel %vm488, 1, 0
    %v505 = vsel %vm489, 1, 0
    %v506 = vsel %vm490, 1, 0
    %v507 = vsel %vm491, 1, 0
    %v508 = vsel %vm492, 1, 0
    %v509 = vsel %vm493, 1, 0
    %v510 = vsel %vm494, 1, 0
    %v511 = vsel %vm495, 1, 0
    %v512 = vsel %vm496, 1, 0
    %v513 = vsel %vm497, 1, 0
    %v514 = vsel %vm498, 1, 0
    %v515 = vcvt.s32.f32 %v499
    %v516 = vcvt.s32.f32 %v500
    %v517 = vcvt.s32.f32 %v501
    %v518 = vcvt.s32.f32 %v502
    %v519 = vcvt.s32.f32 %v503
    %v520 = vcvt.s32.f32 %v504
    %v521 = vcvt.s32.f32 %v505
    %v522 = vcvt.s32.f32 %v506
    %v523 = vcvt.s32.f32 %v507
    %v524 = vcvt.s32.f32 %v508
    %v525 = vcvt.s32.f32 %v509
    %v526 = vcvt.s32.f32 %v510
    %v527 = vcvt.s32.f32 %v511
    %v528 = vcvt.s32.f32 %v512
    %v529 = vcvt.s32.f32 %v513
    %v530 = vcvt.s32.f32 %v514
    %v531 = vpack.c.bf16 %v516, %v515
    %v532 = vpack.c.bf16 %v518, %v517
    %v533 = vpack.c.bf16 %v520, %v519
    %v534 = vpack.c.bf16 %v522, %v521
    %v535 = vpack.c.bf16 %v524, %v523
    %v536 = vpack.c.bf16 %v526, %v525
    %v537 = vpack.c.bf16 %v528, %v527
    %v538 = vpack.c.bf16 %v530, %v529
    %539 = vmatprep.subr.bf16.mxu0 0
    %540 = vmatpush1.bf16.msra.mxu0 %v538
    %541 = vmatprep.subr.bf16.mxu0 0
    %542 = vmatpush1.bf16.msra.mxu0 %v537
    %543 = vmatprep.subr.bf16.mxu0 0
    %544 = vmatpush1.bf16.msra.mxu0 %v536
    %545 = vmatprep.subr.bf16.mxu0 0
    %546 = vmatpush1.bf16.msra.mxu0 %v535
    %547 = vmatprep.subr.bf16.mxu0 0
    %548 = vmatpush1.bf16.msra.mxu0 %v534
    %549 = vmatprep.subr.bf16.mxu0 0
    %550 = vmatpush1.bf16.msra.mxu0 %v533
    %551 = vmatprep.subr.bf16.mxu0 0
    %552 = vmatpush1.bf16.msra.mxu0 %v532
    %553 = vmatprep.subr.bf16.mxu0 0
    %554 = vmatpush1.bf16.msra.mxu0 %v531
    %555 = vmatprep.subr.bf16.mxu0 0
    %556 = vmatpush2.bf16.msra.mxu0 0
    %557 = vmatprep.subr.bf16.mxu0 0
    %558 = vmatpush2.bf16.msra.mxu0 0
    %559 = vmatprep.subr.bf16.mxu0 0
    %560 = vmatpush2.bf16.msra.mxu0 0
    %561 = vmatprep.subr.bf16.mxu0 0
    %562 = vmatpush2.bf16.msra.mxu0 0
    %563 = vmatprep.subr.bf16.mxu0 0
    %564 = vmatpush2.bf16.msra.mxu0 0
    %565 = vmatprep.subr.bf16.mxu0 0
    %566 = vmatpush2.bf16.msra.mxu0 0
    %567 = vmatprep.subr.bf16.mxu0 0
    %568 = vmatpush2.bf16.msra.mxu0 0
    %569 = vmatprep.subr.bf16.mxu0 0
    %570 = vmatpush2.bf16.msra.mxu0 0
    %571 = vmatprep.mubr.bf16.mxu0 0
    %572 = vmatmul.mubr.bf16.gmra.mxu0 %v411
    %v573 = vpop.f32.mrf.mxu0
    %v574 = vadd.f32 0.0, %v573
    %v575 = vpop.f32.mrf.mxu0
    %v576 = vpop.f32.mrf.mxu0
    %v577 = vadd.f32 0.0, %v576
    %v578 = vpop.f32.mrf.mxu0
    %579 = vmatprep.mubr.bf16.mxu0 0
    %580 = vmatmul.mubr.bf16.gmra.mxu0 %v412
    %v581 = vpop.f32.mrf.mxu0
    %v582 = vadd.f32 0.0, %v581
    %v583 = vpop.f32.mrf.mxu0
    %v584 = vpop.f32.mrf.mxu0
    %v585 = vadd.f32 0.0, %v584
    %v586 = vpop.f32.mrf.mxu0
    %587 = vmatprep.mubr.bf16.mxu0 0
    %588 = vmatmul.mubr.bf16.gmra.mxu0 %v413
    %v589 = vpop.f32.mrf.mxu0
    %v590 = vadd.f32 0.0, %v589
    %v591 = vpop.f32.mrf.mxu0
    %v592 = vpop.f32.mrf.mxu0
    %v593 = vadd.f32 0.0, %v592
    %v594 = vpop.f32.mrf.mxu0
    %595 = vmatprep.mubr.bf16.mxu0 0
    %596 = vmatmul.mubr.bf16.gmra.mxu0 %v414
    %v597 = vpop.f32.mrf.mxu0
    %v598 = vadd.f32 0.0, %v597
    %v599 = vpop.f32.mrf.mxu0
    %v600 = vpop.f32.mrf.mxu0
    %v601 = vadd.f32 0.0, %v600
    %v602 = vpop.f32.mrf.mxu0
    %603 = vmatprep.mubr.bf16.mxu0 0
    %604 = vmatmul.mubr.bf16.gmra.mxu0 %v415
    %v605 = vpop.f32.mrf.mxu0
    %v606 = vadd.f32 0.0, %v605
    %v607 = vpop.f32.mrf.mxu0
    %v608 = vpop.f32.mrf.mxu0
    %v609 = vadd.f32 0.0, %v608
    %v610 = vpop.f32.mrf.mxu0
    %611 = vmatprep.mubr.bf16.mxu0 0
    %612 = vmatmul.mubr.bf16.gmra.mxu0 %v416
    %v613 = vpop.f32.mrf.mxu0
    %v614 = vadd.f32 0.0, %v613
    %v615 = vpop.f32.mrf.mxu0
    %v616 = vpop.f32.mrf.mxu0
    %v617 = vadd.f32 0.0, %v616
    %v618 = vpop.f32.mrf.mxu0
    %619 = vmatprep.mubr.bf16.mxu0 0
    %620 = vmatmul.mubr.bf16.gmra.mxu0 %v417
    %v621 = vpop.f32.mrf.mxu0
    %v622 = vadd.f32 0.0, %v621
    %v623 = vpop.f32.mrf.mxu0
    %v624 = vpop.f32.mrf.mxu0
    %v625 = vadd.f32 0.0, %v624
    %v626 = vpop.f32.mrf.mxu0
    %627 = vmatprep.mubr.bf16.mxu0 0
    %628 = vmatmul.mubr.bf16.gmra.mxu0 %v418
    %v629 = vpop.f32.mrf.mxu0
    %v630 = vadd.f32 0.0, %v629
    %v631 = vpop.f32.mrf.mxu0
    %v632 = vpop.f32.mrf.mxu0
    %v633 = vadd.f32 0.0, %v632
    %v634 = vpop.f32.mrf.mxu0
    %635 = vdwg.mxu0
    %v636 = vmin.f32 %v574, 1.0
    %v637 = vmin.f32 %v577, 1.0
    %v638 = vmin.f32 %v582, 1.0
    %v639 = vmin.f32 %v585, 1.0
    %v640 = vmin.f32 %v590, 1.0
    %v641 = vmin.f32 %v593, 1.0
    %v642 = vmin.f32 %v598, 1.0
    %v643 = vmin.f32 %v601, 1.0
    %v644 = vmin.f32 %v606, 1.0
    %v645 = vmin.f32 %v609, 1.0
    %v646 = vmin.f32 %v614, 1.0
    %v647 = vmin.f32 %v617, 1.0
    %v648 = vmin.f32 %v622, 1.0
    %v649 = vmin.f32 %v625, 1.0
    %v650 = vmin.f32 %v630, 1.0
    %v651 = vmin.f32 %v633, 1.0
    %v652 = vld [vmem:[#allocation2] sm:$0x1]
    %v653 = vmul.f32 %v342, %v636
    %v654 = vmul.f32 %v343, %v637
    %v655 = vmul.f32 %v344, %v638
    %v656 = vmul.f32 %v345, %v639
    %v657 = vmul.f32 %v346, %v640
    %v658 = vmul.f32 %v347, %v641
    %v659 = vmul.f32 %v348, %v642
    %v660 = vmul.f32 %v349, %v643
    %v661 = vmul.f32 %v350, %v644
    %v662 = vmul.f32 %v351, %v645
    %v663 = vmul.f32 %v352, %v646
    %v664 = vmul.f32 %v353, %v647
    %v665 = vmul.f32 %v354, %v648
    %v666 = vmul.f32 %v355, %v649
    %v667 = vmul.f32 %v356, %v650
    %v668 = vmul.f32 %v357, %v651
    %v669 = vadd.f32 %v653, %v654
    %v670 = vadd.f32 %v669, %v655
    %v671 = vadd.f32 %v670, %v656
    %v672 = vadd.f32 %v671, %v657
    %v673 = vadd.f32 %v672, %v658
    %v674 = vadd.f32 %v673, %v659
    %v675 = vadd.f32 %v674, %v660
    %v676 = vadd.f32 %v675, %v661
    %v677 = vadd.f32 %v676, %v662
    %v678 = vadd.f32 %v677, %v663
    %v679 = vadd.f32 %v678, %v664
    %v680 = vadd.f32 %v679, %v665
    %v681 = vadd.f32 %v680, %v666
    %v682 = vadd.f32 %v681, %v667
    %v683 = vadd.f32 %v682, %v668
    %684 = vadd.xlane.f32.xlu0 %v683
    %v685 = vpop.xlane.xlu0 %684
    %v686 = vrot.slane %v685, 4
    %v687 = vadd.f32 %v685, %v686
    %v688 = vrot.slane %v687, 2
    %v689 = vadd.f32 %v687, %v688
    %v690 = vrot.slane %v689, 1
    %v691 = vadd.f32 %v689, %v690
    %s692 = vtos %v691
    %v693 = vstv %s692
    %v694 = vadd.f32 %v652, %v693
    %vm695 = vcmask 0
    %696 = vst.msk [vmem:[#allocation2] sm:$0x1] %vm695, %v694
    %v697 = vld [vmem:[#allocation3] sm:$0x1]
    %v698 = vadd.f32 %v342, %v343
    %v699 = vadd.f32 %v698, %v344
    %v700 = vadd.f32 %v699, %v345
    %v701 = vadd.f32 %v700, %v346
    %v702 = vadd.f32 %v701, %v347
    %v703 = vadd.f32 %v702, %v348
    %v704 = vadd.f32 %v703, %v349
    %v705 = vadd.f32 %v704, %v350
    %v706 = vadd.f32 %v705, %v351
    %v707 = vadd.f32 %v706, %v352
    %v708 = vadd.f32 %v707, %v353
    %v709 = vadd.f32 %v708, %v354
    %v710 = vadd.f32 %v709, %v355
    %v711 = vadd.f32 %v710, %v356
    %v712 = vadd.f32 %v711, %v357
    %713 = vadd.xlane.f32.xlu0 %v712
    %v714 = vpop.xlane.xlu0 %713
    %v715 = vrot.slane %v714, 4
    %v716 = vadd.f32 %v714, %v715
    %v717 = vrot.slane %v716, 2
    %v718 = vadd.f32 %v716, %v717
    %v719 = vrot.slane %v718, 1
    %v720 = vadd.f32 %v718, %v719
    %s721 = vtos %v720
    %v722 = vstv %s721
    %v723 = vadd.f32 %v697, %v722
    %724 = vst.msk [vmem:[#allocation3] sm:$0x1] %vm695, %v723
    %v725 = vld [vmem:[#allocation4] sm:$0x1]
    %v726 = vadd.f32 %v636, %v637
    %v727 = vadd.f32 %v726, %v638
    %v728 = vadd.f32 %v727, %v639
    %v729 = vadd.f32 %v728, %v640
    %v730 = vadd.f32 %v729, %v641
    %v731 = vadd.f32 %v730, %v642
    %v732 = vadd.f32 %v731, %v643
    %v733 = vadd.f32 %v732, %v644
    %v734 = vadd.f32 %v733, %v645
    %v735 = vadd.f32 %v734, %v646
    %v736 = vadd.f32 %v735, %v647
    %v737 = vadd.f32 %v736, %v648
    %v738 = vadd.f32 %v737, %v649
    %v739 = vadd.f32 %v738, %v650
    %v740 = vadd.f32 %v739, %v651
    %741 = vadd.xlane.f32.xlu0 %v740
    %v742 = vpop.xlane.xlu0 %741
    %v743 = vrot.slane %v742, 4
    %v744 = vadd.f32 %v742, %v743
    %v745 = vrot.slane %v744, 2
    %v746 = vadd.f32 %v744, %v745
    %v747 = vrot.slane %v746, 1
    %v748 = vadd.f32 %v746, %v747
    %s749 = vtos %v748
    %v750 = vstv %s749
    %v751 = vadd.f32 %v725, %v750
    %752 = vst.msk [vmem:[#allocation4] sm:$0x1] %vm695, %v751
    // Predicated region
    $region22: #{tpu_custom_call.1} parent=1 // pred_check
      %p753 = pneg %p19
    $region23: #{tpu_custom_call.1} parent=1 // pred_check_branch
      %755 = sbr.rel (%p753) target = $region25
    $region24: #{tpu_custom_call.1} parent=1 // pred_region
      %v756 = vld [vmem:[#allocation2] sm:$0x1]
      %v757 = vld [vmem:[#allocation3] sm:$0x1]
      %v758 = vld [vmem:[#allocation4] sm:$0x1]
      %v759 = vadd.f32 %v757, %v758
      %v760 = vsub.f32 %v759, %v756
      %v761 = vrcp.pop %v760
      %v762 = vmul.f32 %v756, %v761
      %763 = vst.msk [vmem:[#allocation5] sm:$0x1] %vm695, %v762
    $region25: #{tpu_custom_call.1} parent=1 // pred_fallthru
      _
    // Predicated region
    $region26: #{tpu_custom_call.1} parent=1 // pred_check
      _
    $region27: #{tpu_custom_call.1} parent=1 // pred_check_branch
      %765 = sbr.rel (0) target = $region29
    $region28: #{tpu_custom_call.1} parent=1 // pred_region
      %s767 = ssub.s32 16, 16
      %768 = vsyncadd [#allocation6], %s767
      %s770 = sshll.u32 [#allocation5], 4
      %s771 = int_to_ptr.vmem [resolvable:$true] %s770
      %773 = dma.vmem_to_hbm [thread:$0]  %s771, 16, %s4, [#allocation6]
    $region29: #{tpu_custom_call.1} parent=1 // pred_fallthru
      _
    // Predicated region
    $region30: #{tpu_custom_call.1} parent=1 // pred_check
      _
    $region31: #{tpu_custom_call.1} parent=1 // pred_check_branch
      %775 = sbr.rel (0) target = $region33
    $region32: #{tpu_custom_call.1} parent=1 // pred_region
      %776 = dma.done [#allocation6], 16
    $region33: #{tpu_custom_call.1} parent=1 // pred_fallthru
      _
    %777 = vsyncpa [#allocation6], 1

</llo_original>
